<compile_context>
chip_gen: v5e
topology: v5e:2x2
jax: 0.10.0
libtpu: 0.0.40
codegen_flags: <defaults>
</compile_context>

<pallas_src>
import jax
import jax.numpy as jnp
from jax.experimental import pallas as pl
from jax.experimental.pallas import tpu as pltpu


_BLOCK_ELEMS = 1024 * 1024          # ~1M elems per block: 4 MiB f32, 2 MiB bf16
_LANE_CANDIDATES = (1024, 512, 256, 128)   # lane-dense last dim (multiple of 128)


def _myselu_kernel(x_ref, o_ref):
    # Compute in f32 regardless of storage dtype (v5e has no bf16 VPU/EUP).
    # TODO(synk): compute natively in bf16 on v6e/v7x to halve vreg pressure.
    x = x_ref[...].astype(jnp.float32)
    # x * 1/(1+exp(-x)) == x / (1 + exp(-x)); exp goes to the EUP slot and the
    # divide (reciprocal + Newton) is also off the DMA critical path.
    o_ref[...] = (x / (1.0 + jnp.exp(-x))).astype(o_ref.dtype)


def _silu_jnp(x: jax.Array) -> jax.Array:
    """Plain-jnp fallback for tiny (<128 element) tails."""
    xf = x.astype(jnp.float32)
    return (xf / (1.0 + jnp.exp(-xf))).astype(x.dtype)


def _myselu_slab(x2d: jax.Array, donate_input: bool = False) -> jax.Array:
    """Run the elementwise kernel over a lane-dense (m, lane) slab (lane % 128 == 0)."""
    m, lane = x2d.shape

    tile_m = _BLOCK_ELEMS // lane          # power-of-2 lane <= 1024 -> multiple of 8
    if tile_m >= m:
        tile_m = m                         # single block spanning the full array
    grid = (pl.cdiv(m, tile_m),)           # last block may be partial; Pallas masks it

    n = m * lane
    elem_bytes = x2d.dtype.itemsize
    cost = pl.CostEstimate(
        flops=4 * n,
        transcendentals=n,                        # one exp per element
        bytes_accessed=2 * n * elem_bytes,        # read x + write out
    )

    return pl.pallas_call(
        _myselu_kernel,
        out_shape=jax.ShapeDtypeStruct((m, lane), x2d.dtype),
        grid=grid,
        in_specs=[pl.BlockSpec((tile_m, lane), lambda i: (i, 0))],
        out_specs=pl.BlockSpec((tile_m, lane), lambda i: (i, 0)),
        compiler_params=pltpu.CompilerParams(
            # Lets v7x's two TensorCores split the streaming grid.
            dimension_semantics=("parallel",),
            # 2 buffers x (in + out) x 4 MiB f32 blocks = 16 MiB, which sits
            # exactly on v5e's 16 MiB scoped default -> raise it explicitly.
            vmem_limit_bytes=48 * 1024 * 1024,
        ),
        cost_estimate=cost,
        input_output_aliases={0: 0} if donate_input else {},
    )(x2d)


def myselu(x: jax.Array, param: jax.Array | None = None, *,
           donate_input: bool = False) -> jax.Array:
    """Elementwise x * sigmoid(x). `param` is unused (matches MYSELUImpl.forward)."""
    del param  # unused in the forward pass, exactly as in the PyTorch module
    orig_shape = x.shape
    n = x.size
    if n == 0:
        return x
    flat = x.reshape(-1)

    n_bulk = (n // 128) * 128
    if n_bulk == 0:
        # Fewer than 128 elements: a kernel launch isn't worth it.
        return _silu_jnp(flat).reshape(orig_shape)

    # Widest lane-dense last dim (multiple of 128) that divides the aligned bulk.
    lane = 128
    for cand in _LANE_CANDIDATES:
        if n_bulk % cand == 0:
            lane = cand
            break

    if n_bulk == n:
        # Free reshape view -> no extra HBM traffic at all.
        out = _myselu_slab(flat.reshape(n // lane, lane), donate_input).reshape(-1)
    else:
        # Element count not a multiple of 128: kernel on the aligned bulk,
        # tiny (<128 elem) tail in plain jnp. Avoids a full-tensor pad + slice
        # (each a full extra HBM round trip) around an HBM-bound kernel.
        bulk_out = _myselu_slab(flat[:n_bulk].reshape(n_bulk // lane, lane),
                                donate_input)
        tail_out = _silu_jnp(flat[n_bulk:])
        out = jnp.concatenate([bulk_out.reshape(-1), tail_out])

    return out.reshape(orig_shape)


class MYSELU:
    """JAX counterpart of the PyTorch MYSELU module."""

    def __init__(self, n: int):
        # nn.Parameter(torch.arange(n).float()) -> deterministic init (unused in fwd).
        self.param = jnp.arange(n, dtype=jnp.float32)

    def __call__(self, x: jax.Array) -> jax.Array:
        return myselu(x, self.param)


if __name__ == "__main__":
    key = jax.random.PRNGKey(0)

    # Small NCHW input consistent with the module's elementwise forward.
    x = jax.random.normal(key, (2, 4, 16, 16), dtype=jnp.float32)
    module = MYSELU(x.shape[1])

    out = jax.block_until_ready(module(x))
    ref = x * jax.nn.sigmoid(x)
    assert out.shape == x.shape and out.dtype == x.dtype
    assert jnp.allclose(out, ref, atol=1e-5, rtol=1e-5)

    # Also exercise the non-multiple-of-128 (bulk + jnp tail) path.
    x_odd = jax.random.normal(jax.random.PRNGKey(0), (2, 3, 7, 11), dtype=jnp.float32)
    out_odd = jax.block_until_ready(myselu(x_odd))
    ref_odd = x_odd * jax.nn.sigmoid(x_odd)
    assert out_odd.shape == x_odd.shape
    assert jnp.allclose(out_odd, ref_odd, atol=1e-5, rtol=1e-5)

    print("KERNEL_OK")
</pallas_src>

<mosaic_0001>
module attributes {stable_mosaic.version = 11 : i64} {
  func.func @_myselu_kernel(%arg0: i32, %arg1: memref<2x1024xf32, #tpu.memory_space<vmem>>, %arg2: memref<2x1024xf32, #tpu.memory_space<vmem>>) attributes {dimension_semantics = [#tpu.dimension_semantics<parallel>], iteration_bounds = array<i64: 1>, scalar_prefetch = 0 : i64, scratch_operands = 0 : i64, tpu.core_type = #tpu.core_type<tc>, window_params = [{transform_indices = @transform_0, window_bounds = array<i64: 2, 1024>}, {transform_indices = @transform_1, window_bounds = array<i64: 2, 1024>}]} {
    %c0 = arith.constant 0 : index
    %c0_0 = arith.constant 0 : index
    %0 = vector.load %arg1[%c0, %c0_0] : memref<2x1024xf32, #tpu.memory_space<vmem>>, vector<2x1024xf32>
    %cst = arith.constant 0.000000e+00 : f32
    %1 = vector.broadcast %cst : f32 to vector<2x1024xf32>
    %2 = arith.subf %1, %0 : vector<2x1024xf32>
    %3 = math.exp %2 : vector<2x1024xf32>
    %cst_1 = arith.constant 1.000000e+00 : f32
    %4 = vector.broadcast %cst_1 : f32 to vector<2x1024xf32>
    %5 = arith.addf %4, %3 : vector<2x1024xf32>
    %6 = arith.divf %0, %5 : vector<2x1024xf32>
    %c0_2 = arith.constant 0 : index
    %c0_3 = arith.constant 0 : index
    %7 = vector.load %arg2[%c0_2, %c0_3] : memref<2x1024xf32, #tpu.memory_space<vmem>>, vector<2x1024xf32>
    tpu.vector_store %arg2[%c0_2, %c0_3], %6 {strides = array<i32>} : memref<2x1024xf32, #tpu.memory_space<vmem>>, vector<2x1024xf32>,
    return
  }
  func.func @transform_0(%arg0: i32) -> (i32, i32) {
    %c0_i32 = arith.constant 0 : i32
    %c0_i32_0 = arith.constant 0 : i32
    return %arg0, %c0_i32 : i32, i32
  }
  func.func @transform_1(%arg0: i32) -> (i32, i32) {
    %c0_i32 = arith.constant 0 : i32
    %c0_i32_0 = arith.constant 0 : i32
    return %arg0, %c0_i32 : i32, i32
  }
}

</mosaic_0001>

<llo_original>
// kernel: tpu_custom_call.1
$region0: #{tpu_custom_call.1}
  #allocation0 [shape = 'u32[]', space=smem, size = 0x4, offset = 0x4, fixed_abs, tag = 'smem constant byte address 0x4 - core index']
  #allocation1 [shape = 'u32[72,128]{1,0:T(1,128)}', space=vmem, size = 0x9000, scoped, tag = 'internal scratch']
  %s0 = inlined_call_operand.hbm [shape: f32[2,1024], index: 0, kind: input, shape index: {}]
  %s1 = inlined_call_operand.hbm [shape: f32[2,1024], index: 1, kind: output, shape index: {}]
  %s2 = sld [smem:[#allocation0]]
  $region18: #{tpu_custom_call.1} parent=0
    _
  %s4 = ssub.s32 1, %s2
  %s5 = scalar_select 0, %s4, %s2
  $region1: #{tpu_custom_call.1} parent=0
    #allocation2 [shape = 'u8[8192]{0}', space=vmem, size = 0x2000, scoped, tag = 'input window, operand 0, single buffered']
    #allocation3 [shape = 's32[1]{0}', space=sflag, size = 0x4, scoped, tag = 'scoped memory for tpu_custom_call.1']
    #allocation4 [shape = 's32[1]{0}', space=sflag, size = 0x4, scoped, tag = 'scoped memory for tpu_custom_call.1']
    #allocation5 [shape = 'u8[8192]{0}', space=vmem, size = 0x2000, scoped, tag = 'output window, operand 0, single buffered']
    %6 = vsyncpa [#allocation3], 0
    %7 = vsyncpa [#allocation4], 0
    // Predicated region
    $region2: #{tpu_custom_call.1} parent=1 // pred_check
      _
    $region3: #{tpu_custom_call.1} parent=1 // pred_check_branch
      %9 = sbr.rel (0) target = $region5
    $region4: #{tpu_custom_call.1} parent=1 // pred_region
      %11 = vsyncadd [#allocation3], 0
      %s13 = sshll.u32 %s0, 4
      %s14 = int_to_ptr.hbm [resolvable:$true] %s13
      %s15 = sshll.u32 [#allocation2], 4
      %s16 = int_to_ptr.vmem [resolvable:$true] %s15
      %18 = dma.hbm_to_vmem [thread:$0]  %s14, 256, %s16, [#allocation3]
    $region5: #{tpu_custom_call.1} parent=1 // pred_fallthru
      _
    // Predicated region
    $region6: #{tpu_custom_call.1} parent=1 // pred_check
      _
    $region7: #{tpu_custom_call.1} parent=1 // pred_check_branch
      %20 = sbr.rel (0) target = $region9
    $region8: #{tpu_custom_call.1} parent=1 // pred_region
      %22 = dma.done [#allocation3], 256
    $region9: #{tpu_custom_call.1} parent=1 // pred_fallthru
      _
    %v23 = vld [vmem:[#allocation2] sm:$0xff]
    %v24 = vld [vmem:[#allocation2 + $0x8] sm:$0xff]
    %v25 = vsub.f32 0.0, %v23
    %v26 = vsub.f32 0.0, %v24
    %v27 = vmul.f32 %v25, 1.442695
    %v28 = vpow.pop %v27
    %v29 = vmul.f32 %v26, 1.442695
    %v30 = vpow.pop %v29
    %v31 = vadd.f32 %v28, 1.0
    %v32 = vadd.f32 %v30, 1.0
    %v33 = vrcp.pop %v31
    %v34 = vmul.f32 %v31, %v33
    %v35 = vsub.f32 1.0, %v34
    %v36 = vmul.f32 %v33, %v35
    %v37 = vadd.f32 %v33, %v36
    %vm38 = vweird.f32 %v31
    %vm39 = vweird.f32 %v33
    %vm40 = vmor %vm38, %vm39
    %v41 = vsel %vm40, %v33, %v37
    %v42 = vand.u32 2147483647, %v31
    %vm43 = vcmp.eq.f32.partialorder %v42, 8.507059e+37
    %v44 = vand.u32 %v31, 2147483648
    %v45 = vor.u32 1.1754944e-38, %v44
    %v46 = vsel %vm43, %v45, %v41
    %v47 = vmul.f32 %v23, %v46
    %v48 = vrcp.pop %v32
    %v49 = vmul.f32 %v32, %v48
    %v50 = vsub.f32 1.0, %v49
    %v51 = vmul.f32 %v48, %v50
    %v52 = vadd.f32 %v48, %v51
    %vm53 = vweird.f32 %v32
    %vm54 = vweird.f32 %v48
    %vm55 = vmor %vm53, %vm54
    %v56 = vsel %vm55, %v48, %v52
    %v57 = vand.u32 2147483647, %v32
    %vm58 = vcmp.eq.f32.partialorder %v57, 8.507059e+37
    %v59 = vand.u32 %v32, 2147483648
    %v60 = vor.u32 1.1754944e-38, %v59
    %v61 = vsel %vm58, %v60, %v56
    %v62 = vmul.f32 %v24, %v61
    %63 = vst [vmem:[#allocation5] sm:$0xff] %v47
    %64 = vst [vmem:[#allocation5 + $0x8] sm:$0xff] %v62
    // Predicated region
    $region10: #{tpu_custom_call.1} parent=1 // pred_check
      _
    $region11: #{tpu_custom_call.1} parent=1 // pred_check_branch
      %66 = sbr.rel (0) target = $region13
    $region12: #{tpu_custom_call.1} parent=1 // pred_region
      %68 = vsyncadd [#allocation4], 0
      %s70 = sshll.u32 [#allocation5], 4
      %s71 = int_to_ptr.vmem [resolvable:$true] %s70
      %s72 = sshll.u32 %s1, 4
      %s73 = int_to_ptr.hbm [resolvable:$true] %s72
      %75 = dma.vmem_to_hbm [thread:$0]  %s71, 256, %s73, [#allocation4]
    $region13: #{tpu_custom_call.1} parent=1 // pred_fallthru
      _
    // Predicated region
    $region14: #{tpu_custom_call.1} parent=1 // pred_check
      _
    $region15: #{tpu_custom_call.1} parent=1 // pred_check_branch
      %77 = sbr.rel (0) target = $region17
    $region16: #{tpu_custom_call.1} parent=1 // pred_region
      %79 = dma.done [#allocation4], 256
    $region17: #{tpu_custom_call.1} parent=1 // pred_fallthru
      _
    %80 = vsyncpa [#allocation3], 1
    %81 = vsyncpa [#allocation4], 1

</llo_original>
